<compile_context>
chip_gen: v6e
topology: v6e:2x2x1
jax: 0.10.0
libtpu: 0.0.40
codegen_flags: <defaults>
</compile_context>

<pallas_src>
import functools

import jax
import jax.numpy as jnp
from jax import lax
from jax.experimental import pallas as pl
from jax.experimental.pallas import tpu as pltpu


def _round_up(x, m):
    return ((x + m - 1) // m) * m


def _vmem_capacity_bytes():
    """Per-core VMEM capacity (generation-aware); conservative fallback if unqueryable."""
    try:
        return int(pltpu.get_tpu_info().vmem_capacity_bytes)
    except Exception:
        return 64 << 20  # v7x per-TensorCore figure; safe lower bound for v5e/v6e too


def mol_kernel(x_ref, w_ref, b_ref, out_ref, *, k, head_w, sig_min, sig_max):
    """Fused pi/sigma/mu head: one MXU matmul + head-block-only f32 epilogue.

    Slab column layout: [pi (k) | sigma (k) | mu (k*y_dim) | zero pad].
    """
    # Cast the activation tile to the weight dtype (bf16 path feeds the MXU natively on all
    # generations); accumulate in f32; bias add + epilogue stay f32 (v5e VPU/EUP safety).
    y = jnp.dot(x_ref[...].astype(w_ref.dtype), w_ref[...],
                preferred_element_type=jnp.float32) + b_ref[...]

    d_pad = out_ref.shape[-1]
    if head_w < d_pad:
        # mu lanes (and the zero pad) pass straight through in one lane-dense store.
        out_ref[...] = y
        yh = y[:, :head_w]
    else:
        yh = y

    col = lax.broadcasted_iota(jnp.int32, yh.shape, 1)
    is_pi = col < k
    is_sig = (col >= k) & (col < 2 * k)

    # pi: masked, max-subtracted softmax over the first k lanes.
    # Mask BEFORE exp: non-pi lanes are pushed to -1e30 and underflow to exactly 0.
    neg_big = jnp.float32(-1e30)
    m = jnp.max(jnp.where(is_pi, yh, neg_big), axis=-1, keepdims=True)
    p = jnp.exp(jnp.where(is_pi, yh, neg_big) - m)
    pi_vals = p * pl.reciprocal(jnp.sum(p, axis=-1, keepdims=True), approx=False)

    # sigma (SHARE_SIG=True): transcendental only sees masked (finite) inputs.
    sig_in = jnp.where(is_sig, yh, 0.0)
    if sig_max is None:
        sig_vals = sig_min + jnp.exp(sig_in)
    else:
        sig_vals = sig_min + (sig_max - sig_min) * jax.nn.sigmoid(sig_in)

    # mu (and any mu/pad lanes inside the head block) is the default pass-through branch.
    out_ref[:, :head_w] = jnp.where(is_pi, pi_vals,
                          jnp.where(is_sig, sig_vals, yh))


def init_params(key, in_dim, k, y_dim):
    """Deterministic PyTorch-Linear-style init: U(-1/sqrt(in_dim), 1/sqrt(in_dim))."""
    bound = 1.0 / jnp.sqrt(jnp.float32(in_dim))
    keys = jax.random.split(key, 6)
    u = lambda kk, shape: jax.random.uniform(kk, shape, jnp.float32, -bound, bound)
    return {
        "w_pi": u(keys[0], (in_dim, k)),
        "b_pi": u(keys[1], (1, k)),
        "w_mu": u(keys[2], (in_dim, k * y_dim)),
        "b_mu": u(keys[3], (1, k * y_dim)),
        "w_sig": u(keys[4], (in_dim, k)),       # SHARE_SIG=True shapes
        "b_sig": u(keys[5], (1, k)),
    }
    # TODO(synk): SHARE_SIG=False variant (fc_sigma -> k*y_dim) not wired up here.


def fuse_params(params, *, k, y_dim, matmul_dtype=jnp.float32):
    """Build the fused [pi | sigma | mu | pad] weight/bias slab ONCE (outside forward)."""
    in_dim = params["w_pi"].shape[0]
    kyd = k * y_dim
    d_out = 2 * k + kyd
    d_pad = _round_up(d_out, 128)          # lane-dense fused output slab width
    w_cat = jnp.zeros((in_dim, d_pad), jnp.float32)
    w_cat = w_cat.at[:, 0:k].set(params["w_pi"])
    w_cat = w_cat.at[:, k:2 * k].set(params["w_sig"])
    w_cat = w_cat.at[:, 2 * k:d_out].set(params["w_mu"])
    b_cat = jnp.zeros((1, d_pad), jnp.float32)
    b_cat = b_cat.at[:, 0:k].set(params["b_pi"])
    b_cat = b_cat.at[:, k:2 * k].set(params["b_sig"])
    b_cat = b_cat.at[:, 2 * k:d_out].set(params["b_mu"])
    # bf16 weights halve the weight DMA and feed the MXU natively; bias stays f32.
    return w_cat.astype(matmul_dtype), b_cat


@functools.partial(jax.jit,
                   static_argnames=("k", "y_dim", "sig_min", "sig_max",
                                    "tile_n", "expand_sigma"))
def mixture_of_logits_forward(x, w_cat, b_cat, *, k, y_dim, sig_min=1e-4, sig_max=None,
                              tile_n=1024, expand_sigma=True):
    N, in_dim = x.shape
    kyd = k * y_dim
    d_out = 2 * k + kyd
    d_pad = w_cat.shape[1]
    assert d_pad == _round_up(d_out, 128), "w_cat/b_cat must come from fuse_params"
    head_w = min(_round_up(2 * k, 128), d_pad)   # epilogue runs only on these lanes

    # Batch tiling: big tiles amortize the ~0.35us/step overhead; keep >=2 grid steps when
    # N allows so the "parallel" axis can shard across both v7x TensorCores.
    tile_n = max(8, min(int(tile_n), _round_up(N, 8)))
    if N > 8:
        tile_n = min(tile_n, _round_up(pl.cdiv(N, 2), 8))
    tile_n = _round_up(tile_n, 8)

    # Generation-aware VMEM budget: double-buffered x/out tiles + (budgeted 2x) weight slab.
    cap = int(0.7 * _vmem_capacity_bytes())
    xb = x.dtype.itemsize
    wb = w_cat.dtype.itemsize

    def vmem_need(t):
        return (2 * t * in_dim * xb          # x tiles (double-buffered)
                + 2 * t * d_pad * 4          # f32 out tiles (double-buffered)
                + 2 * in_dim * d_pad * wb    # W_cat (resident; budget 2x for safety)
                + 2 * 8 * d_pad * 4)         # bias

    while vmem_need(tile_n) > cap and tile_n > 256:
        tile_n = _round_up(max(tile_n // 2, 8), 8)
    grid = (pl.cdiv(N, tile_n),)
    vmem_bytes = int(min(max(vmem_need(tile_n) + (2 << 20), 8 << 20), cap))

    kernel = functools.partial(mol_kernel, k=k, head_w=head_w,
                               sig_min=float(sig_min),
                               sig_max=None if sig_max is None else float(sig_max))

    out = pl.pallas_call(
        kernel,
        out_shape=jax.ShapeDtypeStruct((N, d_pad), jnp.float32),
        grid=grid,
        in_specs=[
            pl.BlockSpec((tile_n, in_dim), lambda i: (i, 0)),   # x: tiled over batch
            pl.BlockSpec((in_dim, d_pad), lambda i: (0, 0)),    # W_cat: VMEM-resident
            pl.BlockSpec((1, d_pad), lambda i: (0, 0)),         # b_cat: VMEM-resident
        ],
        out_specs=pl.BlockSpec((tile_n, d_pad), lambda i: (i, 0)),
        compiler_params=pltpu.CompilerParams(
            dimension_semantics=("parallel",),
            vmem_limit_bytes=vmem_bytes),
    )(x, w_cat, b_cat)

    # Layout glue only; fused by XLA under jit (no separate eager HBM passes).
    pi = out[:, 0:k]
    sig_shared = out[:, k:2 * k]
    mu = out[:, 2 * k:2 * k + kyd].reshape(N, k, y_dim)
    if expand_sigma:
        # Matches torch's expand_as output shape; pass expand_sigma=False to keep sigma as
        # [N, k] and let the consumer broadcast lazily (skips writing y_dim x more bytes).
        sigma = jnp.broadcast_to(sig_shared[:, :, None], (N, k, y_dim))
    else:
        sigma = sig_shared
    return {"pi": pi, "mu": mu, "sigma": sigma}


def reference_forward(x, params, *, k, y_dim, sig_min=1e-4, sig_max=None):
    pi = jax.nn.softmax(x @ params["w_pi"] + params["b_pi"], axis=1)
    mu = (x @ params["w_mu"] + params["b_mu"]).reshape(-1, k, y_dim)
    s = (x @ params["w_sig"] + params["b_sig"])[:, :, None]
    s = jnp.broadcast_to(s, mu.shape)
    if sig_max is None:
        sigma = sig_min + jnp.exp(s)
    else:
        sigma = sig_min + (sig_max - sig_min) * jax.nn.sigmoid(s)
    return {"pi": pi, "mu": mu, "sigma": sigma}


if __name__ == "__main__":
    key = jax.random.PRNGKey(0)

    def check(out, ref, atol, rtol):
        for name in ("pi", "mu", "sigma"):
            assert out[name].shape == ref[name].shape, name
            assert jnp.allclose(out[name], ref[name], atol=atol, rtol=rtol), name

    # Case 1: small batch, single grid step, unbounded-sigma (exp) branch, f32 matmul.
    N, in_dim, k, y_dim = 8, 32, 5, 10
    kx, kp, key = jax.random.split(key, 3)
    x = jax.random.normal(kx, (N, in_dim), jnp.float32)
    params = init_params(kp, in_dim, k, y_dim)
    w_cat, b_cat = fuse_params(params, k=k, y_dim=y_dim, matmul_dtype=jnp.float32)
    out = mixture_of_logits_forward(x, w_cat, b_cat, k=k, y_dim=y_dim,
                                    sig_min=1e-4, sig_max=None)
    jax.block_until_ready(out)
    ref = reference_forward(x, params, k=k, y_dim=y_dim, sig_min=1e-4, sig_max=None)
    check(out, ref, 1e-5, 1e-5)

    # Case 2: multi-tile grid (tile_n=8 -> 3 steps), d_pad (256) > head block (128) so the
    # split-epilogue / pass-through-mu path runs, bounded-sigma (sigmoid) branch, f32 matmul.
    N2, in_dim2, y_dim2 = 24, 64, 40
    kx2, kp2, key = jax.random.split(key, 3)
    x2 = jax.random.normal(kx2, (N2, in_dim2), jnp.float32)
    params2 = init_params(kp2, in_dim2, k, y_dim2)
    w_cat2, b_cat2 = fuse_params(params2, k=k, y_dim=y_dim2, matmul_dtype=jnp.float32)
    out2 = mixture_of_logits_forward(x2, w_cat2, b_cat2, k=k, y_dim=y_dim2,
                                     sig_min=1e-4, sig_max=2.0, tile_n=8)
    jax.block_until_ready(out2)
    ref2 = reference_forward(x2, params2, k=k, y_dim=y_dim2, sig_min=1e-4, sig_max=2.0)
    check(out2, ref2, 1e-5, 1e-5)

    # Case 3: bf16 fused weights (halved weight DMA, MXU-native), default tile_n with the
    # >=2-grid-step clamp engaged; relaxed tolerance vs the f32 reference.
    N3, in_dim3 = 32, 64
    kx3, kp3 = jax.random.split(key)
    x3 = jax.random.normal(kx3, (N3, in_dim3), jnp.float32)
    params3 = init_params(kp3, in_dim3, k, y_dim)
    w_cat3, b_cat3 = fuse_params(params3, k=k, y_dim=y_dim, matmul_dtype=jnp.bfloat16)
    out3 = mixture_of_logits_forward(x3, w_cat3, b_cat3, k=k, y_dim=y_dim,
                                     sig_min=1e-4, sig_max=None)
    jax.block_until_ready(out3)
    ref3 = reference_forward(x3, params3, k=k, y_dim=y_dim, sig_min=1e-4, sig_max=None)
    check(out3, ref3, 3e-2, 3e-2)

    print("KERNEL_OK")
</pallas_src>

<mosaic_0001>
module attributes {stable_mosaic.version = 11 : i64} {
  func.func @mol_kernel(%arg0: i32, %arg1: memref<8x32xf32, #tpu.memory_space<vmem>>, %arg2: memref<32x128xf32, #tpu.memory_space<vmem>>, %arg3: memref<1x128xf32, #tpu.memory_space<vmem>>, %arg4: memref<8x128xf32, #tpu.memory_space<vmem>>) attributes {dimension_semantics = [#tpu.dimension_semantics<parallel>], iteration_bounds = array<i64: 1>, scalar_prefetch = 0 : i64, scratch_operands = 0 : i64, tpu.core_type = #tpu.core_type<tc>, window_params = [{transform_indices = @transform_0, window_bounds = array<i64: 8, 32>}, {pipeline_mode = #tpu.pipeline_mode<synchronous>, transform_indices = @transform_1, window_bounds = array<i64: 32, 128>}, {pipeline_mode = #tpu.pipeline_mode<synchronous>, transform_indices = @transform_2, window_bounds = array<i64: 1, 128>}, {transform_indices = @transform_3, window_bounds = array<i64: 8, 128>}]} {
    %c0 = arith.constant 0 : index
    %c0_0 = arith.constant 0 : index
    %0 = vector.load %arg1[%c0, %c0_0] : memref<8x32xf32, #tpu.memory_space<vmem>>, vector<8x32xf32>
    %c0_1 = arith.constant 0 : index
    %c0_2 = arith.constant 0 : index
    %1 = vector.load %arg2[%c0_1, %c0_2] : memref<32x128xf32, #tpu.memory_space<vmem>>, vector<32x128xf32>
    %cst = arith.constant dense<0.000000e+00> : vector<8x128xf32>
    %2 = tpu.matmul %0, %1, %cst {dimension_numbers = #tpu.dot_dimension_numbers<[1], [0], [0], [1], [0, 0, 1, 1], [], []>} : vector<8x32xf32>, vector<32x128xf32>, vector<8x128xf32> -> vector<8x128xf32>
    %c0_3 = arith.constant 0 : index
    %c0_4 = arith.constant 0 : index
    %3 = vector.load %arg3[%c0_3, %c0_4] : memref<1x128xf32, #tpu.memory_space<vmem>>, vector<1x128xf32>
    %4 = vector.broadcast %3 : vector<1x128xf32> to vector<8x128xf32>
    %5 = arith.addf %2, %4 : vector<8x128xf32>
    %6 = tpu.iota {dimensions = array<i32: 1>} : vector<8x128xi32>
    %c5_i32 = arith.constant 5 : i32
    %7 = vector.broadcast %c5_i32 : i32 to vector<8x128xi32>
    %8 = arith.cmpi slt, %6, %7 : vector<8x128xi32>
    %c5_i32_5 = arith.constant 5 : i32
    %9 = vector.broadcast %c5_i32_5 : i32 to vector<8x128xi32>
    %10 = arith.cmpi sge, %6, %9 : vector<8x128xi32>
    %c10_i32 = arith.constant 10 : i32
    %11 = vector.broadcast %c10_i32 : i32 to vector<8x128xi32>
    %12 = arith.cmpi slt, %6, %11 : vector<8x128xi32>
    %13 = arith.andi %10, %12 : vector<8x128xi1>
    %cst_6 = arith.constant -1.000000e+30 : f32
    %14 = vector.broadcast %cst_6 : f32 to vector<8x128xf32>
    %15 = arith.select %8, %5, %14 : vector<8x128xi1>, vector<8x128xf32>
    %cst_7 = arith.constant dense<0xFF800000> : vector<8xf32>
    %16 = vector.multi_reduction <maximumf>, %15, %cst_7 [1] : vector<8x128xf32> to vector<8xf32>
    %17 = vector.shape_cast %16 : vector<8xf32> to vector<8x1xf32>
    %cst_8 = arith.constant -1.000000e+30 : f32
    %18 = vector.broadcast %cst_8 : f32 to vector<8x128xf32>
    %19 = arith.select %8, %5, %18 : vector<8x128xi1>, vector<8x128xf32>
    %20 = vector.broadcast %17 : vector<8x1xf32> to vector<8x128xf32>
    %21 = arith.subf %19, %20 : vector<8x128xf32>
    %22 = math.exp %21 : vector<8x128xf32>
    %cst_9 = arith.constant dense<0.000000e+00> : vector<8xf32>
    %23 = vector.multi_reduction <add>, %22, %cst_9 [1] : vector<8x128xf32> to vector<8xf32>
    %24 = vector.shape_cast %23 : vector<8xf32> to vector<8x1xf32>
    %25 = tpu.reciprocal %24 : vector<8x1xf32> -> vector<8x1xf32>
    %26 = vector.broadcast %25 : vector<8x1xf32> to vector<8x128xf32>
    %27 = arith.mulf %22, %26 : vector<8x128xf32>
    %cst_10 = arith.constant 0.000000e+00 : f32
    %28 = vector.broadcast %cst_10 : f32 to vector<8x128xf32>
    %29 = arith.select %13, %5, %28 : vector<8x128xi1>, vector<8x128xf32>
    %30 = math.exp %29 : vector<8x128xf32>
    %cst_11 = arith.constant 9.99999974E-5 : f32
    %31 = vector.broadcast %cst_11 : f32 to vector<8x128xf32>
    %32 = arith.addf %31, %30 : vector<8x128xf32>
    %33 = arith.select %13, %32, %5 : vector<8x128xi1>, vector<8x128xf32>
    %34 = arith.select %8, %27, %33 : vector<8x128xi1>, vector<8x128xf32>
    %c0_12 = arith.constant 0 : index
    %c0_13 = arith.constant 0 : index
    %35 = vector.load %arg4[%c0_12, %c0_13] : memref<8x128xf32, #tpu.memory_space<vmem>>, vector<8x128xf32>
    tpu.vector_store %arg4[%c0_12, %c0_13], %34 {strides = array<i32>} : memref<8x128xf32, #tpu.memory_space<vmem>>, vector<8x128xf32>,
    return
  }
  func.func @transform_0(%arg0: i32) -> (i32, i32) {
    %c0_i32 = arith.constant 0 : i32
    %c0_i32_0 = arith.constant 0 : i32
    return %arg0, %c0_i32 : i32, i32
  }
  func.func @transform_1(%arg0: i32) -> (i32, i32) {
    %c0_i32 = arith.constant 0 : i32
    %c0_i32_0 = arith.constant 0 : i32
    %c0_i32_1 = arith.constant 0 : i32
    return %c0_i32, %c0_i32_0 : i32, i32
  }
  func.func @transform_2(%arg0: i32) -> (i32, i32) {
    %c0_i32 = arith.constant 0 : i32
    %c0_i32_0 = arith.constant 0 : i32
    %c0_i32_1 = arith.constant 0 : i32
    return %c0_i32, %c0_i32_0 : i32, i32
  }
  func.func @transform_3(%arg0: i32) -> (i32, i32) {
    %c0_i32 = arith.constant 0 : i32
    %c0_i32_0 = arith.constant 0 : i32
    return %arg0, %c0_i32 : i32, i32
  }
}

</mosaic_0001>

<llo_original>
// kernel: mixture_of_logits_forward.1
$region0: #{mixture_of_logits_forward.1}
  #allocation0 [shape = 'u32[]', space=smem, size = 0x4, offset = 0x4, fixed_abs, tag = 'smem constant byte address 0x4 - core index']
  #allocation1 [shape = 'u32[144,128]{1,0:T(1,128)}', space=vmem, size = 0x12000, scoped, tag = 'internal scratch']
  %s0 = inlined_call_operand.hbm [shape: f32[8,32], index: 0, kind: input, shape index: {}]
  %s1 = inlined_call_operand.hbm [shape: f32[32,128], index: 1, kind: input, shape index: {}]
  %s2 = inlined_call_operand.hbm [shape: f32[1,128], index: 2, kind: input, shape index: {}]
  %s3 = inlined_call_operand.vmem [shape: f32[8,128], index: 3, kind: output, shape index: {}]
  %s4 = sld [smem:[#allocation0]]
  $region34: #{mixture_of_logits_forward.1} parent=0
    _
  %s6 = ssub.s32 1, %s4
  %s7 = scalar_select 0, %s6, %s4
  $region1: #{mixture_of_logits_forward.1} parent=0
    #allocation2 [shape = 'u8[4096]{0}', space=vmem, size = 0x1000, scoped, tag = 'input window, operand 0, single buffered']
    #allocation3 [shape = 's32[1]{0}', space=sflag, size = 0x4, scoped, tag = 'scoped memory for mixture_of_logits_forward.1']
    #allocation4 [shape = 'u8[16384]{0}', space=vmem, size = 0x4000, scoped, tag = 'input window, operand 1, single buffered']
    #allocation5 [shape = 's32[1]{0}', space=sflag, size = 0x4, scoped, tag = 'scoped memory for mixture_of_logits_forward.1']
    #allocation6 [shape = 'u8[512]{0}', space=vmem, size = 0x400, scoped, tag = 'input window, operand 2, single buffered']
    %8 = vsyncpa [#allocation3], 0
    %9 = vsyncpa [#allocation5], 0
    // Predicated region
    $region2: #{mixture_of_logits_forward.1} parent=1 // pred_check
      _
    $region3: #{mixture_of_logits_forward.1} parent=1 // pred_check_branch
      %11 = sbr.rel (0) target = $region5
    $region4: #{mixture_of_logits_forward.1} parent=1 // pred_region
      %s13 = ssub.s32 128, 128
      %14 = vsyncadd [#allocation3], %s13
      %s16 = sshll.u32 [#allocation2], 4
      %s17 = int_to_ptr.vmem [resolvable:$true] %s16
      %19 = dma.hbm_to_vmem [thread:$0]  %s0, 128, %s17, [#allocation3]
    $region5: #{mixture_of_logits_forward.1} parent=1 // pred_fallthru
      _
    // Predicated region
    $region6: #{mixture_of_logits_forward.1} parent=1 // pred_check
      _
    $region7: #{mixture_of_logits_forward.1} parent=1 // pred_check_branch
      %21 = sbr.rel (0) target = $region9
    $region8: #{mixture_of_logits_forward.1} parent=1 // pred_region
      %s23 = ssub.s32 512, 512
      %24 = vsyncadd [#allocation5], %s23
      %s25 = sshll.u32 [#allocation4], 4
      %s26 = int_to_ptr.vmem [resolvable:$true] %s25
      %31 = dma.hbm_to_vmem [thread:$0]  %s1, 512, %s26, [#allocation5], 128, 128, 8
    $region9: #{mixture_of_logits_forward.1} parent=1 // pred_fallthru
      _
    // Predicated region
    $region10: #{mixture_of_logits_forward.1} parent=1 // pred_check
      _
    $region11: #{mixture_of_logits_forward.1} parent=1 // pred_check_branch
      %33 = sbr.rel (0) target = $region13
    $region12: #{mixture_of_logits_forward.1} parent=1 // pred_region
      %s35 = ssub.s32 16, 16
      %36 = vsyncadd [#allocation5], %s35
      %s38 = sshll.u32 [#allocation6], 4
      %s39 = int_to_ptr.vmem [resolvable:$true] %s38
      %41 = dma.hbm_to_vmem [thread:$0]  %s2, 16, %s39, [#allocation5]
    $region13: #{mixture_of_logits_forward.1} parent=1 // pred_fallthru
      _
    // Predicated region
    $region14: #{mixture_of_logits_forward.1} parent=1 // pred_check
      _
    $region15: #{mixture_of_logits_forward.1} parent=1 // pred_check_branch
      %43 = sbr.rel (0) target = $region17
    $region16: #{mixture_of_logits_forward.1} parent=1 // pred_region
      %44 = dma.done [#allocation3], 128
    $region17: #{mixture_of_logits_forward.1} parent=1 // pred_fallthru
      _
    // Predicated region
    $region18: #{mixture_of_logits_forward.1} parent=1 // pred_check
      _
    $region19: #{mixture_of_logits_forward.1} parent=1 // pred_check_branch
      %46 = sbr.rel (0) target = $region21
    $region20: #{mixture_of_logits_forward.1} parent=1 // pred_region
      %47 = dma.done [#allocation5], 512
    $region21: #{mixture_of_logits_forward.1} parent=1 // pred_fallthru
      _
    // Predicated region
    $region22: #{mixture_of_logits_forward.1} parent=1 // pred_check
      _
    $region23: #{mixture_of_logits_forward.1} parent=1 // pred_check_branch
      %49 = sbr.rel (0) target = $region25
    $region24: #{mixture_of_logits_forward.1} parent=1 // pred_region
      %50 = dma.done [#allocation5], 16
    $region25: #{mixture_of_logits_forward.1} parent=1 // pred_fallthru
      _
    %v51 = vld [vmem:[#allocation2] sm:$0xff]
    %v52 = vld [vmem:[#allocation4] sm:$0xff]
    %v53 = vld [vmem:[#allocation4 + $0x8] sm:$0xff]
    %v54 = vld [vmem:[#allocation4 + $0x10] sm:$0xff]
    %v55 = vld [vmem:[#allocation4 + $0x18] sm:$0xff]
    %v56 = vld [vmem:[#allocation6] sm:$0x1]
    %v58 = vlaneseq
    %v59 = vshrl.u32 %v58, 7
    %v60 = vsub.s32 0, %v59
    %v61 = vrot.slane %v56, %v60
    %vm63 = vcmask 261120
    %v65 = vsel %vm63, %v51, 0
    %67 = vmatprep.subr.mxu0 0.0
    %68 = vmatpush1.msra.mxu0 0.0
    %69 = vmatprep.subr.mxu0 0.0
    %70 = vmatpush1.msra.mxu0 0.0
    %71 = vmatprep.subr.mxu0 0.0
    %72 = vmatpush1.msra.mxu0 0.0
    %73 = vmatprep.subr.mxu0 0.0
    %74 = vmatpush1.msra.mxu0 0.0
    %75 = vmatprep.subr.mxu0 0.0
    %76 = vmatpush1.msra.mxu0 0.0
    %77 = vmatprep.subr.mxu0 0.0
    %78 = vmatpush1.msra.mxu0 0.0
    %79 = vmatprep.subr.mxu0 0.0
    %80 = vmatpush1.msra.mxu0 0.0
    %81 = vmatprep.subr.mxu0 0.0
    %82 = vmatpush1.msra.mxu0 0.0
    %83 = vmatprep.subr.mxu0 0.0
    %84 = vmatpush1.msra.mxu0 0.0
    %85 = vmatprep.subr.mxu0 0.0
    %86 = vmatpush1.msra.mxu0 0.0
    %87 = vmatprep.subr.mxu0 0.0
    %88 = vmatpush1.msra.mxu0 0.0
    %89 = vmatprep.subr.mxu0 0.0
    %90 = vmatpush1.msra.mxu0 0.0
    %91 = vmatprep.subr.mxu0 0.0
    %92 = vmatpush1.msra.mxu0 %v55
    %93 = vmatprep.subr.mxu0 0.0
    %94 = vmatpush1.msra.mxu0 %v54
    %95 = vmatprep.subr.mxu0 0.0
    %96 = vmatpush1.msra.mxu0 %v53
    %97 = vmatprep.subr.mxu0 0.0
    %98 = vmatpush1.msra.mxu0 %v52
    %99 = vmatprep.subr.mxu0 0.0
    %100 = vmatpush2.msra.mxu0 0.0
    %101 = vmatprep.subr.mxu0 0.0
    %102 = vmatpush2.msra.mxu0 0.0
    %103 = vmatprep.subr.mxu0 0.0
    %104 = vmatpush2.msra.mxu0 0.0
    %105 = vmatprep.subr.mxu0 0.0
    %106 = vmatpush2.msra.mxu0 0.0
    %107 = vmatprep.subr.mxu0 0.0
    %108 = vmatpush2.msra.mxu0 0.0
    %109 = vmatprep.subr.mxu0 0.0
    %110 = vmatpush2.msra.mxu0 0.0
    %111 = vmatprep.subr.mxu0 0.0
    %112 = vmatpush2.msra.mxu0 0.0
    %113 = vmatprep.subr.mxu0 0.0
    %114 = vmatpush2.msra.mxu0 0.0
    %115 = vmatprep.subr.mxu0 0.0
    %116 = vmatpush2.msra.mxu0 0.0
    %117 = vmatprep.subr.mxu0 0.0
    %118 = vmatpush2.msra.mxu0 0.0
    %119 = vmatprep.subr.mxu0 0.0
    %120 = vmatpush2.msra.mxu0 0.0
    %121 = vmatprep.subr.mxu0 0.0
    %122 = vmatpush2.msra.mxu0 0.0
    %123 = vmatprep.subr.mxu0 0.0
    %124 = vmatpush2.msra.mxu0 0.0
    %125 = vmatprep.subr.mxu0 0.0
    %126 = vmatpush2.msra.mxu0 0.0
    %127 = vmatprep.subr.mxu0 0.0
    %128 = vmatpush2.msra.mxu0 0.0
    %129 = vmatprep.subr.mxu0 0.0
    %130 = vmatpush2.msra.mxu0 0.0
    %131 = vmatprep.mubr.f32.mxu0 0.0
    %132 = vmatmul.mubr.f32.gmra.mxu0 %v65
    %v133 = vpop.f32.mrf.mxu0
    %v134 = vadd.f32 %v61, %v133
    %v135 = vpop.f32.mrf.mxu0
    %136 = vdwg.mxu0
    %v137 = vlaneseq
    %v138 = vand.u32 %v137, 127
    %vm139 = vcmp.lt.s32.totalorder %v138, 5
    %vm140 = vcmp.ge.s32.totalorder %v138, 5
    %vm141 = vcmp.lt.s32.totalorder %v138, 10
    %vm142 = vmand %vm140, %vm141
    %v143 = vsel %vm139, %v134, -1e+30
    %144 = vmax.xlane.f32.xlu0 %v143
    %v145 = vpop.xlane.xlu0 %144
    %v146 = vsub.f32 %v143, %v145
    %v147 = vmul.f32 %v146, 1.442695
    %v148 = vpow.pop %v147
    %149 = vadd.xlane.f32.xlu0 %v148
    %v150 = vpop.xlane.xlu0 %149
    %v151 = vrcp.pop %v150
    %v152 = vmul.f32 %v148, %v151
    %v153 = vsel %vm142, %v134, 0.0
    %v154 = vmul.f32 %v153, 1.442695
    %v155 = vpow.pop %v154
    %v156 = vadd.f32 %v155, 0.0001
    %v157 = vsel %vm142, %v156, %v134
    %v158 = vsel %vm139, %v152, %v157
    %159 = vst [vmem:[%s3] sm:$0xff] %v158
    // Predicated region
    $region26: #{mixture_of_logits_forward.1} parent=1 // pred_check
      _
    $region27: #{mixture_of_logits_forward.1} parent=1 // pred_check_branch
      %161 = sbr.rel (0) target = $region29
    $region28: #{mixture_of_logits_forward.1} parent=1 // pred_region
      _
    $region29: #{mixture_of_logits_forward.1} parent=1 // pred_fallthru
      _
    // Predicated region
    $region30: #{mixture_of_logits_forward.1} parent=1 // pred_check
      _
    $region31: #{mixture_of_logits_forward.1} parent=1 // pred_check_branch
      %163 = sbr.rel (0) target = $region33
    $region32: #{mixture_of_logits_forward.1} parent=1 // pred_region
      _
    $region33: #{mixture_of_logits_forward.1} parent=1 // pred_fallthru
      _
    %164 = vsyncpa [#allocation3], 1
    %165 = vsyncpa [#allocation5], 1

</llo_original>
